<compile_context>
chip_gen: v7x
topology: tpu7x:2x2x1
jax: 0.10.0
libtpu: 0.0.40
codegen_flags: <defaults>
</compile_context>

<pallas_src>
import functools

import jax
import jax.numpy as jnp
from jax.experimental import pallas as pl
from jax.experimental.pallas import tpu as pltpu


def _layernorm_cf_kernel(x_ref, w_ref, b_ref, o_ref, *, eps):
    # x_ref / o_ref: (1, C, T); w_ref / b_ref: (1, C, 1), already f32.
    x = x_ref[0].astype(jnp.float32)                       # (C, T)
    # One-pass statistics over the channel (sublane) axis, f32 accumulation.
    u = jnp.mean(x, axis=0, keepdims=True)                 # (1, T)
    ex2 = jnp.mean(x * x, axis=0, keepdims=True)           # (1, T)
    var = jnp.maximum(ex2 - u * u, 0.0)                    # clamp guards f32 cancellation
    inv = jax.lax.rsqrt(var + eps)                         # rsqrt -> EUP slot (off the VALU)
    w = w_ref[0]                                           # (C, 1), broadcast along lanes
    b = b_ref[0]
    o_ref[0] = ((x - u) * inv * w + b).astype(o_ref.dtype)


def layer_norm_channels_first(x, weight, bias, eps=1e-6, tile_hw=None,
                              vmem_limit_bytes=None):
    """x: (N, C, H, W). weight/bias: (C,). Returns same shape/dtype as x."""
    N, C, H, W = x.shape
    HW = H * W
    itemsize = jnp.dtype(x.dtype).itemsize

    # Free reshapes only — no data movement in HBM. Params pre-cast to f32 so the
    # per-step in-kernel .astype disappears.
    x3 = x.reshape(N, C, HW)
    w3 = weight.astype(jnp.float32).reshape(1, C, 1)
    b3 = bias.astype(jnp.float32).reshape(1, C, 1)

    # Generation-aware VMEM capacity (v5e/v6e: 128 MiB; v7x: 64 MiB/TC).
    try:
        vmem_capacity = int(pltpu.get_tpu_info().vmem_capacity_bytes)
    except Exception:
        vmem_capacity = 64 * 1024 * 1024  # conservative fallback (safe on every gen)

    if tile_hw is None:
        # Budget for the pipelined blocks (2x double-buffered input + 2x output tiles of
        # C*tile_hw elements each). Large tiles amortize the ~0.35us/step grid overhead;
        # past ~512 lanes the roofline fraction saturates, so the v7x cap costs <1%.
        if vmem_capacity <= 96 * 1024 * 1024:      # v7x-class (64 MiB/TC)
            block_budget = 14 * 1024 * 1024
        else:                                      # v5e / v6e (128 MiB)
            block_budget = 20 * 1024 * 1024
        t = block_budget // (4 * C * itemsize)
        t = max(128, (t // 128) * 128)             # keep lane axis 128-aligned
        tile_hw = int(min(HW, t))

        # Megacore balance (v7x has 2 TCs): keep at least ~4 grid steps when possible.
        min_steps = 4
        steps = N * ((HW + tile_hw - 1) // tile_hw)
        if steps < min_steps and HW > 128:
            needed = (min_steps + N - 1) // N
            cap = max(128, (((HW + needed - 1) // needed) // 128) * 128)
            tile_hw = int(min(tile_hw, cap))

    if vmem_limit_bytes is None:
        # Actual footprint: pipelined blocks + single-buffered lane-padded f32 params
        # + f32 working copies (for sub-32-bit inputs the tile is materialized in f32),
        # plus margin for Mosaic internal scratch. Clamped under physical VMEM.
        sub_pad = ((C + 7) // 8) * 8
        param_bytes = 2 * sub_pad * 128 * 4                 # w/b, lane-padded 1 -> 128
        block_bytes = 4 * C * tile_hw * itemsize            # 2x in + 2x out buffers
        f32_tmp = (2 if itemsize < 4 else 1) * C * tile_hw * 4
        vmem_limit_bytes = block_bytes + param_bytes + f32_tmp + 8 * 1024 * 1024
        vmem_limit_bytes = max(vmem_limit_bytes, 32 * 1024 * 1024)
        vmem_limit_bytes = min(vmem_limit_bytes, vmem_capacity - 8 * 1024 * 1024)

    grid = (N, pl.cdiv(HW, tile_hw))                        # ragged tail handled by masking

    out3 = pl.pallas_call(
        functools.partial(_layernorm_cf_kernel, eps=eps),
        out_shape=jax.ShapeDtypeStruct((N, C, HW), x.dtype),
        grid_spec=pltpu.PrefetchScalarGridSpec(
            num_scalar_prefetch=0,
            grid=grid,
            in_specs=[
                pl.BlockSpec((1, C, tile_hw), lambda n, t: (n, 0, t)),
                # Constant index_map -> fetched once; single-buffer to avoid paying the
                # 1->128 lane padding twice in VMEM.
                pl.BlockSpec((1, C, 1), lambda n, t: (0, 0, 0),
                             pipeline_mode=pl.Buffered(1)),
                pl.BlockSpec((1, C, 1), lambda n, t: (0, 0, 0),
                             pipeline_mode=pl.Buffered(1)),
            ],
            out_specs=pl.BlockSpec((1, C, tile_hw), lambda n, t: (n, 0, t)),
        ),
        compiler_params=pltpu.CompilerParams(
            dimension_semantics=("parallel", "parallel"),   # shard across TCs (v7x)
            vmem_limit_bytes=int(vmem_limit_bytes),
        ),
    )(x3, w3, b3)

    return out3.reshape(N, C, H, W)


def layer_norm_reference(x, weight, bias, eps=1e-6):
    """Plain-JAX reproduction of the PyTorch channels_first forward."""
    in_dtype = x.dtype
    xf = x.astype(jnp.float32)
    u = jnp.mean(xf, axis=1, keepdims=True)
    s = jnp.mean((xf - u) ** 2, axis=1, keepdims=True)
    y = (xf - u) / jnp.sqrt(s + eps)
    y = weight.astype(jnp.float32)[None, :, None, None] * y \
        + bias.astype(jnp.float32)[None, :, None, None]
    return y.astype(in_dtype)


if __name__ == "__main__":
    key = jax.random.PRNGKey(0)

    # --- Test 1: module-consistent small NCHW input (normalized_shape = C = 4) ---
    N, C, H, W = 2, 4, 16, 16
    kx, kw, kb, kx2, kw2, kb2 = jax.random.split(key, 6)
    x = jax.random.normal(kx, (N, C, H, W), dtype=jnp.float32)
    # PyTorch init is ones/zeros; perturb slightly so the affine transform is exercised.
    weight = jnp.ones((C,), jnp.float32) + 0.1 * jax.random.normal(kw, (C,), jnp.float32)
    bias = 0.1 * jax.random.normal(kb, (C,), jnp.float32)

    out = layer_norm_channels_first(x, weight, bias, eps=1e-6)
    out = jax.block_until_ready(out)
    ref = layer_norm_reference(x, weight, bias, eps=1e-6)
    assert out.shape == x.shape and out.dtype == x.dtype
    assert jnp.allclose(out, ref, atol=1e-5, rtol=1e-5), "mismatch vs reference (test 1)"

    # --- Test 2: ragged spatial extent + forced small tile to exercise the
    #             masked partial-block path (no jnp.pad in the wrapper). ---
    N2, C2, H2, W2 = 2, 32, 10, 13   # HW = 130, not a multiple of 128
    x2 = jax.random.normal(kx2, (N2, C2, H2, W2), dtype=jnp.float32)
    weight2 = jnp.ones((C2,), jnp.float32) + 0.1 * jax.random.normal(kw2, (C2,), jnp.float32)
    bias2 = 0.1 * jax.random.normal(kb2, (C2,), jnp.float32)

    out2 = layer_norm_channels_first(x2, weight2, bias2, eps=1e-6, tile_hw=128)
    out2 = jax.block_until_ready(out2)
    ref2 = layer_norm_reference(x2, weight2, bias2, eps=1e-6)
    assert out2.shape == x2.shape and out2.dtype == x2.dtype
    assert jnp.allclose(out2, ref2, atol=1e-5, rtol=1e-5), "mismatch vs reference (test 2)"

    # --- Test 3: default (auto) tile path on bf16 input, mixed-dtype affine. ---
    x3 = jax.random.normal(kx2, (2, 64, 12, 12), dtype=jnp.bfloat16)
    w3_ = jnp.ones((64,), jnp.float32)
    b3_ = jnp.zeros((64,), jnp.float32)
    out3 = jax.block_until_ready(layer_norm_channels_first(x3, w3_, b3_, eps=1e-6))
    ref3 = layer_norm_reference(x3, w3_, b3_, eps=1e-6)
    assert out3.shape == x3.shape and out3.dtype == x3.dtype
    assert jnp.allclose(out3.astype(jnp.float32), ref3.astype(jnp.float32),
                        atol=2e-2, rtol=2e-2), "mismatch vs reference (test 3)"

    print("KERNEL_OK")
</pallas_src>

<mosaic_0001>
module attributes {stable_mosaic.version = 11 : i64} {
  func.func @_layernorm_cf_kernel(%arg0: i32, %arg1: i32, %arg2: memref<1x4x128xf32, #tpu.memory_space<vmem>>, %arg3: memref<1x4x1xf32, #tpu.memory_space<vmem>>, %arg4: memref<1x4x1xf32, #tpu.memory_space<vmem>>, %arg5: memref<1x4x128xf32, #tpu.memory_space<vmem>>) attributes {dimension_semantics = [#tpu.dimension_semantics<parallel>, #tpu.dimension_semantics<parallel>], iteration_bounds = array<i64: 2, 2>, scalar_prefetch = 0 : i64, scratch_operands = 0 : i64, tpu.core_type = #tpu.core_type<tc>, window_params = [{transform_indices = @transform_0, window_bounds = array<i64: 1, 4, 128>}, {pipeline_mode = #tpu.pipeline_mode<synchronous>, transform_indices = @transform_1, window_bounds = array<i64: 1, 4, 1>}, {pipeline_mode = #tpu.pipeline_mode<synchronous>, transform_indices = @transform_2, window_bounds = array<i64: 1, 4, 1>}, {transform_indices = @transform_3, window_bounds = array<i64: 1, 4, 128>}]} {
    %c0 = arith.constant 0 : index
    %c0_0 = arith.constant 0 : index
    %c0_1 = arith.constant 0 : index
    %0 = vector.load %arg2[%c0, %c0_0, %c0_1] : memref<1x4x128xf32, #tpu.memory_space<vmem>>, vector<1x4x128xf32>
    %1 = vector.shape_cast %0 : vector<1x4x128xf32> to vector<4x128xf32>
    %cst = arith.constant dense<0.000000e+00> : vector<128xf32>
    %2 = vector.multi_reduction <add>, %1, %cst [0] : vector<4x128xf32> to vector<128xf32>
    %3 = vector.shape_cast %2 : vector<128xf32> to vector<1x128xf32>
    %cst_2 = arith.constant 4.000000e+00 : f32
    %4 = vector.broadcast %cst_2 : f32 to vector<1x128xf32>
    %5 = arith.divf %3, %4 : vector<1x128xf32>
    %6 = arith.mulf %1, %1 : vector<4x128xf32>
    %cst_3 = arith.constant dense<0.000000e+00> : vector<128xf32>
    %7 = vector.multi_reduction <add>, %6, %cst_3 [0] : vector<4x128xf32> to vector<128xf32>
    %8 = vector.shape_cast %7 : vector<128xf32> to vector<1x128xf32>
    %cst_4 = arith.constant 4.000000e+00 : f32
    %9 = vector.broadcast %cst_4 : f32 to vector<1x128xf32>
    %10 = arith.divf %8, %9 : vector<1x128xf32>
    %11 = arith.mulf %5, %5 : vector<1x128xf32>
    %12 = arith.subf %10, %11 : vector<1x128xf32>
    %cst_5 = arith.constant 0.000000e+00 : f32
    %13 = vector.broadcast %cst_5 : f32 to vector<1x128xf32>
    %14 = arith.maximumf %12, %13 : vector<1x128xf32>
    %cst_6 = arith.constant 9.99999997E-7 : f32
    %15 = vector.broadcast %cst_6 : f32 to vector<1x128xf32>
    %16 = arith.addf %14, %15 : vector<1x128xf32>
    %17 = math.rsqrt %16 : vector<1x128xf32>
    %c0_7 = arith.constant 0 : index
    %c0_8 = arith.constant 0 : index
    %c0_9 = arith.constant 0 : index
    %18 = vector.load %arg3[%c0_7, %c0_8, %c0_9] : memref<1x4x1xf32, #tpu.memory_space<vmem>>, vector<1x4x1xf32>
    %19 = vector.shape_cast %18 : vector<1x4x1xf32> to vector<4x1xf32>
    %c0_10 = arith.constant 0 : index
    %c0_11 = arith.constant 0 : index
    %c0_12 = arith.constant 0 : index
    %20 = vector.load %arg4[%c0_10, %c0_11, %c0_12] : memref<1x4x1xf32, #tpu.memory_space<vmem>>, vector<1x4x1xf32>
    %21 = vector.shape_cast %20 : vector<1x4x1xf32> to vector<4x1xf32>
    %22 = vector.broadcast %5 : vector<1x128xf32> to vector<4x128xf32>
    %23 = arith.subf %1, %22 : vector<4x128xf32>
    %24 = vector.broadcast %17 : vector<1x128xf32> to vector<4x128xf32>
    %25 = arith.mulf %23, %24 : vector<4x128xf32>
    %26 = vector.broadcast %19 : vector<4x1xf32> to vector<4x128xf32>
    %27 = arith.mulf %25, %26 : vector<4x128xf32>
    %28 = vector.broadcast %21 : vector<4x1xf32> to vector<4x128xf32>
    %29 = arith.addf %27, %28 : vector<4x128xf32>
    %c0_13 = arith.constant 0 : index
    %c0_14 = arith.constant 0 : index
    %c0_15 = arith.constant 0 : index
    %30 = vector.load %arg5[%c0_13, %c0_14, %c0_15] : memref<1x4x128xf32, #tpu.memory_space<vmem>>, vector<1x4x128xf32>
    %31 = vector.shape_cast %30 : vector<1x4x128xf32> to vector<4x128xf32>
    %32 = vector.shape_cast %29 : vector<4x128xf32> to vector<1x4x128xf32>
    tpu.vector_store %arg5[%c0_13, %c0_14, %c0_15], %32 {strides = array<i32>} : memref<1x4x128xf32, #tpu.memory_space<vmem>>, vector<1x4x128xf32>,
    return
  }
  func.func @transform_0(%arg0: i32, %arg1: i32) -> (i32, i32, i32) {
    %c0_i32 = arith.constant 0 : i32
    %c0_i32_0 = arith.constant 0 : i32
    return %arg0, %c0_i32, %arg1 : i32, i32, i32
  }
  func.func @transform_1(%arg0: i32, %arg1: i32) -> (i32, i32, i32) {
    %c0_i32 = arith.constant 0 : i32
    %c0_i32_0 = arith.constant 0 : i32
    %c0_i32_1 = arith.constant 0 : i32
    %c0_i32_2 = arith.constant 0 : i32
    return %c0_i32, %c0_i32_0, %c0_i32_1 : i32, i32, i32
  }
  func.func @transform_2(%arg0: i32, %arg1: i32) -> (i32, i32, i32) {
    %c0_i32 = arith.constant 0 : i32
    %c0_i32_0 = arith.constant 0 : i32
    %c0_i32_1 = arith.constant 0 : i32
    %c0_i32_2 = arith.constant 0 : i32
    return %c0_i32, %c0_i32_0, %c0_i32_1 : i32, i32, i32
  }
  func.func @transform_3(%arg0: i32, %arg1: i32) -> (i32, i32, i32) {
    %c0_i32 = arith.constant 0 : i32
    %c0_i32_0 = arith.constant 0 : i32
    return %arg0, %c0_i32, %arg1 : i32, i32, i32
  }
}

</mosaic_0001>

<llo_original>
// kernel: tpu_custom_call.1
$region0: #{tpu_custom_call.1}
  #allocation0 [shape = 'u32[]', space=smem, size = 0x4, offset = 0x4, fixed_abs, tag = 'smem constant byte address 0x4 - core index']
  #allocation1 [shape = 'u32[144,128]{1,0:T(1,128)}', space=vmem, size = 0x12000, scoped, tag = 'internal scratch']
  %s0 = inlined_call_operand.hbm [shape: f32[2,4,256], index: 0, kind: input, shape index: {}]
  %s1 = inlined_call_operand.vmem [shape: f32[1,4,1], index: 1, kind: input, shape index: {}]
  %s2 = inlined_call_operand.vmem [shape: f32[1,4,1], index: 2, kind: input, shape index: {}]
  %s3 = inlined_call_operand.hbm [shape: f32[2,4,256], index: 3, kind: output, shape index: {}]
  %s4 = sld [smem:[#allocation0]]
  $region49: #{tpu_custom_call.1} parent=0
    _
  %s6 = ssub.s32 1, %s4
  %s7 = scalar_select 0, %s6, %s4
  $region1: #{tpu_custom_call.1} parent=0
    #allocation2 [shape = 'u8[4096]{0}', space=vmem, size = 0x1000, scoped, tag = 'input window, operand 0']
    #allocation3 [shape = 's32[2]{0}', space=sflag, size = 0x8, scoped, tag = 'scoped memory for tpu_custom_call.1']
    #allocation4 [shape = 's32[2]{0}', space=sflag, size = 0x8, scoped, tag = 'scoped memory for tpu_custom_call.1']
    #allocation5 [shape = 'u8[4096]{0}', space=vmem, size = 0x1000, scoped, tag = 'output window, operand 0']
    %8 = vsyncpa [#allocation3], 0
    %s9 = scalar_lea.sflag [#allocation3], 1
    %10 = vsyncpa %s9, 0
    %11 = vsyncpa [#allocation4], 0
    %s12 = scalar_lea.sflag [#allocation4], 1
    %13 = vsyncpa %s12, 0
    loop: start=0, step=1, limit=6
    $region2: #{tpu_custom_call.1} parent=1 // loop_pre_header
      _
    $region3: #{tpu_custom_call.1} parent=1 // loop_header
      %s15 = sphi 0, %s19
      %p16 = scmp.ge.s32.totalorder %s15, 6
      %s22 = sphi 0, %s34
      %s23 = sphi 0, %s30
      %s24 = sphi 0, %s22
      %s25 = sphi 0, %s23
      %s26 = sphi 0, %s24
      %s27 = sphi 0, %s25
      %s39 = sphi 0, %s41
      %s42 = sphi 0, %s39
      %s43 = sphi 0, %s42
      %s59 = sphi 0, %s43
      %s63 = sphi 0, %s63
      %s65 = sphi 0, %s63
      %s66 = sphi 0, %s65
      %s80 = sphi 0, %s66
      %s84 = sphi 0, %s84
      %s86 = sphi 0, %s84
      %s87 = sphi 0, %s86
      %s101 = sphi 0, %s87
      %s109 = sphi 0, %s111
      %s112 = sphi 0, %s109
      %s113 = sphi 0, %s112
      %s129 = sphi 0, %s113
    $region4: #{tpu_custom_call.1} parent=1 // loop_header_branch
      %18 = sbr.rel (%p16) target = $region8
    $region5: #{tpu_custom_call.1} parent=1 // loop_body
      %s20 = ssub.s32 %s15, 1
      %s21 = ssub.s32 %s15, 2
      %s28 = sadd.s32 1, %s23
      %p29 = scmp.ge.s32.totalorder %s28, 2
      %s30 = scalar_select %p29, 0, %s28
      %s31 = sadd.s32 1, %s22
      %s32 = scalar_select %p29, %s31, %s22
      %p33 = scmp.ge.s32.totalorder %s32, 2
      %s34 = scalar_select %p33, 0, %s32
      %s35 = ssub.s32 %s22, %s34
      %s36 = ssub.s32 %s23, %s30
      %s37 = sor.u32 %s35, %s36
      %p38 = scmp.eq.s32.totalorder %s37, 0
      %s40 = sadd.s32 %s39, 1
      %s41 = scalar_select %p38, %s39, %s40
      %p44 = pneg %p38
      %p45 = scmp.eq.s32.totalorder %s15, 3
      %p46 = por %p44, %p45
      %p47 = scmp.ne.s32.totalorder %s39, %s42
      %p48 = scmp.eq.s32.totalorder %s15, 0
      %p49 = por %p47, %p48
      %p50 = scmp.ne.s32.totalorder %s39, %s42
      %p51 = scmp.eq.s32.totalorder %s20, 3
      %p52 = por %p50, %p51
      %p53 = scmp.ne.s32.totalorder %s42, %s43
      %p54 = scmp.eq.s32.totalorder %s20, 0
      %p55 = por %p53, %p54
      %p56 = scmp.ne.s32.totalorder %s42, %s43
      %p57 = scmp.eq.s32.totalorder %s21, 3
      %p58 = por %p56, %p57
      %p60 = scmp.ne.s32.totalorder %s43, %s59
      %p61 = scmp.eq.s32.totalorder %s21, 0
      %p62 = por %p60, %p61
      %s64 = sadd.s32 %s63, 1
      %p67 = scmp.eq.s32.totalorder %s15, 3
      %p68 = scmp.ne.s32.totalorder %s63, %s65
      %p69 = scmp.eq.s32.totalorder %s15, 0
      %p70 = por %p68, %p69
      %p71 = scmp.ne.s32.totalorder %s63, %s65
      %p72 = scmp.eq.s32.totalorder %s20, 3
      %p73 = por %p71, %p72
      %p74 = scmp.ne.s32.totalorder %s65, %s66
      %p75 = scmp.eq.s32.totalorder %s20, 0
      %p76 = por %p74, %p75
      %p77 = scmp.ne.s32.totalorder %s65, %s66
      %p78 = scmp.eq.s32.totalorder %s21, 3
      %p79 = por %p77, %p78
      %p81 = scmp.ne.s32.totalorder %s66, %s80
      %p82 = scmp.eq.s32.totalorder %s21, 0
      %p83 = por %p81, %p82
      %s85 = sadd.s32 %s84, 1
      %p88 = scmp.eq.s32.totalorder %s15, 3
      %p89 = scmp.ne.s32.totalorder %s84, %s86
      %p90 = scmp.eq.s32.totalorder %s15, 0
      %p91 = por %p89, %p90
      %p92 = scmp.ne.s32.totalorder %s84, %s86
      %p93 = scmp.eq.s32.totalorder %s20, 3
      %p94 = por %p92, %p93
      %p95 = scmp.ne.s32.totalorder %s86, %s87
      %p96 = scmp.eq.s32.totalorder %s20, 0
      %p97 = por %p95, %p96
      %p98 = scmp.ne.s32.totalorder %s86, %s87
      %p99 = scmp.eq.s32.totalorder %s21, 3
      %p100 = por %p98, %p99
      %p102 = scmp.ne.s32.totalorder %s87, %s101
      %p103 = scmp.eq.s32.totalorder %s21, 0
      %p104 = por %p102, %p103
      %s105 = ssub.s32 %s22, %s34
      %s106 = ssub.s32 %s23, %s30
      %s107 = sor.u32 %s105, %s106
      %p108 = scmp.eq.s32.totalorder %s107, 0
      %s110 = sadd.s32 %s109, 1
      %s111 = scalar_select %p108, %s109, %s110
      %p114 = pneg %p108
      %p115 = scmp.eq.s32.totalorder %s15, 3
      %p116 = por %p114, %p115
      %p117 = scmp.ne.s32.totalorder %s109, %s112
      %p118 = scmp.eq.s32.totalorder %s15, 0
      %p119 = por %p117, %p118
      %p120 = scmp.ne.s32.totalorder %s109, %s112
      %p121 = scmp.eq.s32.totalorder %s20, 3
      %p122 = por %p120, %p121
      %p123 = scmp.ne.s32.totalorder %s112, %s113
      %p124 = scmp.eq.s32.totalorder %s20, 0
      %p125 = por %p123, %p124
      %p126 = scmp.ne.s32.totalorder %s112, %s113
      %p127 = scmp.eq.s32.totalorder %s21, 3
      %p128 = por %p126, %p127
      %p130 = scmp.ne.s32.totalorder %s113, %s129
      %p131 = scmp.eq.s32.totalorder %s21, 0
      %p132 = por %p130, %p131
      %p133 = scmp.le.s32.totalorder 1, %s15
      %p134 = scmp.lt.s32.totalorder %s15, 5
      %p135 = pnand %p133, %p134
      %p136 = pneg %p135
      // Predicated region
      $region9: #{tpu_custom_call.1} parent=5 // pred_check
        _
      $region10: #{tpu_custom_call.1} parent=5 // pred_check_branch
        %138 = sbr.rel (%p135) target = $region12
      $region11: #{tpu_custom_call.1} parent=5 // pred_region
        %s139 = ssub.s32 %s15, 1
        // Predicated region
        $region13: #{tpu_custom_call.1} parent=11 // pred_check
          %p140 = pneg %p76
        $region14: #{tpu_custom_call.1} parent=11 // pred_check_branch
          %142 = sbr.rel (%p140) target = $region16
        $region15: #{tpu_custom_call.1} parent=11 // pred_region
          _
        $region16: #{tpu_custom_call.1} parent=11 // pred_fallthru
          _
        // Predicated region
        $region17: #{tpu_custom_call.1} parent=11 // pred_check
          %p143 = pneg %p97
        $region18: #{tpu_custom_call.1} parent=11 // pred_check_branch
          %145 = sbr.rel (%p143) target = $region20
        $region19: #{tpu_custom_call.1} parent=11 // pred_region
          _
        $region20: #{tpu_custom_call.1} parent=11 // pred_fallthru
          _
      $region12: #{tpu_custom_call.1} parent=5 // pred_fallthru
        _
      %p146 = scmp.lt.s32.totalorder %s15, 4
      // Predicated region
      $region21: #{tpu_custom_call.1} parent=5 // pred_check
        %p147 = pneg %p146
      $region22: #{tpu_custom_call.1} parent=5 // pred_check_branch
        %149 = sbr.rel (%p147) target = $region24
      $region23: #{tpu_custom_call.1} parent=5 // pred_region
        // Predicated region
        $region25: #{tpu_custom_call.1} parent=23 // pred_check
          %p150 = pneg %p49
        $region26: #{tpu_custom_call.1} parent=23 // pred_check_branch
          %152 = sbr.rel (%p150) target = $region28
        $region27: #{tpu_custom_call.1} parent=23 // pred_region
          %s153 = sand.u32 %s39, 1
          %s154 = scalar_lea.sflag [#allocation3], %s153
          %s155 = sand.u32 %s39, 1
          %s156 = smul.addr %s155, 4
          %s157 = scalar_lea.vmem [#allocation2], %s156
          %s159 = ssub.s32 64, 64
          %160 = vsyncadd %s154, %s159
          %s161 = smul.addr %s22, 2
          %s162 = sadd.s32 %s23, %s161
          %s163 = smul.addr %s162, 64
          %s164 = scalar_lea.hbm %s0, %s163
          %s166 = sshll.u32 %s157, 4
          %s167 = int_to_ptr.vmem [resolvable:$true] %s166
          %169 = dma.hbm_to_vmem [thread:$0]  %s164, 64, %s167, %s154
        $region28: #{tpu_custom_call.1} parent=23 // pred_fallthru
          _
      $region24: #{tpu_custom_call.1} parent=5 // pred_fallthru
        _
      %p170 = scmp.le.s32.totalorder 1, %s15
      %p171 = scmp.lt.s32.totalorder %s15, 5
      %p172 = pnand %p170, %p171
      %p173 = pneg %p172
      // Predicated region
      $region29: #{tpu_custom_call.1} parent=5 // pred_check
        _
      $region30: #{tpu_custom_call.1} parent=5 // pred_check_branch
        %175 = sbr.rel (%p172) target = $region32
      $region31: #{tpu_custom_call.1} parent=5 // pred_region
        %s176 = ssub.s32 %s15, 1
        %s177 = sand.u32 %s42, 1
        %s178 = scalar_lea.sflag [#allocation3], %s177
        %s179 = sand.u32 %s42, 1
        %s180 = smul.addr %s179, 4
        %s181 = scalar_lea.vmem [#allocation2], %s180
        // Predicated region
        $region33: #{tpu_custom_call.1} parent=31 // pred_check
          %p182 = pneg %p55
        $region34: #{tpu_custom_call.1} parent=31 // pred_check_branch
          %184 = sbr.rel (%p182) target = $region36
        $region35: #{tpu_custom_call.1} parent=31 // pred_region
          %185 = dma.done %s178, 64
        $region36: #{tpu_custom_call.1} parent=31 // pred_fallthru
          _
        %s186 = sand.u32 %s42, 1
        %s187 = scalar_lea.sflag [#allocation3], %s186
        %s188 = sand.u32 %s42, 1
        %s189 = smul.addr %s188, 4
        %s190 = scalar_lea.vmem [#allocation2], %s189
        %p191 = pneg %p55
        %p192 = pneg %p52
        %p193 = pneg %p76
        %p194 = pneg %p73
        %p195 = pneg %p97
        %p196 = pneg %p94
        %p197 = pneg %p125
        %p198 = pneg %p122
        %s199 = sand.u32 %s112, 1
        %s200 = scalar_lea.sflag [#allocation4], %s199
        %s201 = sand.u32 %s112, 1
        %s202 = smul.addr %s201, 4
        %s203 = scalar_lea.vmem [#allocation5], %s202
        %v204 = vld [vmem:[%s181] sm:$0xf]
        %vm205 = vcmask 1043456
        %v206 = vsel %vm205, %v204, 0.0
        %v207 = vrot.slane %v206, 4
        %v208 = vadd.f32 %v206, %v207
        %v209 = vrot.slane %v208, 2
        %v210 = vadd.f32 %v208, %v209
        %v211 = vrot.slane %v210, 1
        %v212 = vadd.f32 %v210, %v211
        %v213 = vrcp.pop 4.0
        %v214 = vmul.f32 %v212, %v213
        %v215 = vmul.f32 %v204, %v204
        %v216 = vsel %vm205, %v215, 0.0
        %v217 = vrot.slane %v216, 4
        %v218 = vadd.f32 %v216, %v217
        %v219 = vrot.slane %v218, 2
        %v220 = vadd.f32 %v218, %v219
        %v221 = vrot.slane %v220, 1
        %v222 = vadd.f32 %v220, %v221
        %v223 = vmul.f32 %v222, %v213
        %v224 = vmul.f32 %v214, %v214
        %v225 = vsub.f32 %v223, %v224
        %v226 = vmax.f32 %v225, 0.0
        %v227 = vadd.f32 %v226, 1e-06
        %v228 = vrsqrt.pop %v227
        %v229 = vld [vmem:[%s1] sm:$0xf]
        %v230 = vld [vmem:[%s2] sm:$0xf]
        %v231 = vsub.f32 %v204, %v214
        %v232 = vmul.f32 %v231, %v228
        %234 = vset.pattern.permute.xlu0 0
        %235 = vperm.xlu0 %234, %v229
        %v236 = vpop.permute.xlu0 %235
        %v238 = vmul.f32 %v232, %v236
        %240 = vset.pattern.permute.xlu0 0
        %241 = vperm.xlu0 %240, %v230
        %v242 = vpop.permute.xlu0 %241
        %v244 = vadd.f32 %v238, %v242
        %245 = vst [vmem:[%s203] sm:$0xf] %v244
        %s246 = sand.u32 %s112, 1
        %s247 = scalar_lea.sflag [#allocation4], %s246
        %s248 = sand.u32 %s112, 1
        %s249 = smul.addr %s248, 4
        %s250 = scalar_lea.vmem [#allocation5], %s249
        // Predicated region
        $region37: #{tpu_custom_call.1} parent=31 // pred_check
          %p251 = pneg %p122
        $region38: #{tpu_custom_call.1} parent=31 // pred_check_branch
          %253 = sbr.rel (%p251) target = $region40
        $region39: #{tpu_custom_call.1} parent=31 // pred_region
          %s255 = ssub.s32 64, 64
          %256 = vsyncadd %s247, %s255
          %s257 = smul.addr %s24, 2
          %s258 = sadd.s32 %s25, %s257
          %s259 = smul.addr %s258, 64
          %s260 = scalar_lea.hbm %s3, %s259
          %s262 = sshll.u32 %s250, 4
          %s263 = int_to_ptr.vmem [resolvable:$true] %s262
          %265 = dma.vmem_to_hbm [thread:$0]  %s263, 64, %s260, %s247
        $region40: #{tpu_custom_call.1} parent=31 // pred_fallthru
          _
      $region32: #{tpu_custom_call.1} parent=5 // pred_fallthru
        _
      %p266 = scmp.le.s32.totalorder 2, %s15
      // Predicated region
      $region41: #{tpu_custom_call.1} parent=5 // pred_check
        %p267 = pneg %p266
      $region42: #{tpu_custom_call.1} parent=5 // pred_check_branch
        %269 = sbr.rel (%p267) target = $region44
      $region43: #{tpu_custom_call.1} parent=5 // pred_region
        %s270 = ssub.s32 %s15, 2
        // Predicated region
        $region45: #{tpu_custom_call.1} parent=43 // pred_check
          %p271 = pneg %p128
        $region46: #{tpu_custom_call.1} parent=43 // pred_check_branch
          %273 = sbr.rel (%p271) target = $region48
        $region47: #{tpu_custom_call.1} parent=43 // pred_region
          %s274 = sand.u32 %s113, 1
          %s275 = scalar_lea.sflag [#allocation4], %s274
          %s276 = sand.u32 %s113, 1
          %s277 = smul.addr %s276, 4
          %s278 = scalar_lea.vmem [#allocation5], %s277
          %279 = dma.done %s275, 64
        $region48: #{tpu_custom_call.1} parent=43 // pred_fallthru
          _
      $region44: #{tpu_custom_call.1} parent=5 // pred_fallthru
        _
    $region6: #{tpu_custom_call.1} parent=1 // loop_footer
      %s19 = sadd.s32 1, %s15
    $region7: #{tpu_custom_call.1} parent=1 // loop_footer_branch
      %14 = sbr.rel target = $region3
    $region8: #{tpu_custom_call.1} parent=1 // loop_exit
      _
    %280 = vsyncpa [#allocation3], 1
    %s281 = scalar_lea.sflag [#allocation3], 1
    %282 = vsyncpa %s281, 1
    %283 = vsyncpa [#allocation4], 1
    %s284 = scalar_lea.sflag [#allocation4], 1
    %285 = vsyncpa %s284, 1

</llo_original>
